<compile_context>
chip_gen: v6e
topology: v6e:2x2x1
jax: 0.10.0
libtpu: 0.0.40
codegen_flags: <defaults>
</compile_context>

<pallas_src>
import jax
import jax.numpy as jnp
from jax.experimental import pallas as pl
from jax.experimental.pallas import tpu as pltpu

EPS = 1e-5


def _rescnn_kernel(x_ref, w1_ref, b1_ref, w2_ref, b2_ref, o_ref):
    # x_ref / o_ref: (C, TILE_L) f32 blocks of one batch element.
    x = x_ref[...]                                                     # single load per element
    # conv1 (k=1) with BN affine pre-folded into w1/b1, then ReLU
    h = jnp.dot(w1_ref[...], x, preferred_element_type=jnp.float32) + b1_ref[...]
    h = jnp.maximum(h, 0.0)
    # conv2 (k=1)
    y = jnp.dot(w2_ref[...], h, preferred_element_type=jnp.float32) + b2_ref[...]
    # residual add (reuse the already-loaded x) + ReLU, single store
    o_ref[...] = jnp.maximum(y + x, 0.0)


def _pick_tile_l(L):
    """Lane-dense tile along L: a multiple of 128 (capped at 2048 lanes) when L
    allows it, otherwise the full L (full-extent blocks are always legal)."""
    if L % 128 == 0:
        for cand in (2048, 1024, 512, 256, 128):
            if L % cand == 0:
                return cand
    return L


def rescnn_forward(x, gamma, beta, w1, b1, w2, b2):
    """x: (N, C, L) float32.  Returns (N, C, L) float32."""
    N, C, L = x.shape
    assert w1.shape == (C, C) and w2.shape == (C, C), (
        "downsample=None requires in_channels == out_channels")

    # ---- BatchNorm1d batch statistics (per channel over N and L, biased var).
    # Plain-XLA precompute: a single cheap mem-bound pass over x; keeps every
    # NL tile of the main kernel independent ("parallel" grid).
    mean = jnp.mean(x, axis=(0, 2))                                     # (C,)
    var = jnp.mean(jnp.square(x - mean[None, :, None]), axis=(0, 2))    # biased
    inv_std = jax.lax.rsqrt(var + EPS)                                  # (C,)

    # ---- Fold the BN affine into conv1 (exact: k=1 conv == channel matmul).
    scale = gamma.reshape(C) * inv_std                                  # (C,)
    shift = beta.reshape(C) - mean * scale                              # (C,)
    w1_eff = w1 * scale[None, :]                                        # scale input-channel cols
    b1_eff = (w1 @ shift + b1.reshape(C)).reshape(C, 1)
    b2_col = b2.reshape(C, 1)

    # ---- Tiling / VMEM budget.
    tile_l = _pick_tile_l(L)
    num_l_tiles = pl.cdiv(L, tile_l)           # tile_l divides L by construction
    # x tile + out tile, double-buffered, plus resident weights/biases + slack.
    vmem_bytes = 4 * C * tile_l * 4 + 4 * C * C * 4 + (1 << 20)
    vmem_bytes = int(min(max(vmem_bytes, 16 * 1024 * 1024), 32 * 1024 * 1024))

    out = pl.pallas_call(
        _rescnn_kernel,
        out_shape=jax.ShapeDtypeStruct((N, C, L), x.dtype),
        grid=(N, num_l_tiles),
        in_specs=[
            # x: batch dim squeezed, lane-dense (C, TILE_L) block per grid step
            pl.BlockSpec((None, C, tile_l), lambda n, l: (n, 0, l)),
            # weights / biases: constant index_map -> stay resident in VMEM
            pl.BlockSpec((C, C), lambda n, l: (0, 0)),   # w1 (BN-folded)
            pl.BlockSpec((C, 1), lambda n, l: (0, 0)),   # b1 (BN-folded)
            pl.BlockSpec((C, C), lambda n, l: (0, 0)),   # w2
            pl.BlockSpec((C, 1), lambda n, l: (0, 0)),   # b2
        ],
        out_specs=pl.BlockSpec((None, C, tile_l), lambda n, l: (n, 0, l)),
        compiler_params=pltpu.CompilerParams(
            dimension_semantics=("parallel", "parallel"),
            vmem_limit_bytes=vmem_bytes,
        ),
    )(x, w1_eff, b1_eff, w2, b2_col)
    return out


def rescnn_reference(x, gamma, beta, w1, b1, w2, b2):
    """Plain-JAX mirror of the PyTorch forward pass (for verification)."""
    mean = jnp.mean(x, axis=(0, 2), keepdims=True)                      # (1, C, 1)
    var = jnp.mean((x - mean) ** 2, axis=(0, 2), keepdims=True)         # biased
    xn = (x - mean) * jax.lax.rsqrt(var + EPS)
    xn = xn * gamma.reshape(1, -1, 1) + beta.reshape(1, -1, 1)
    h = jnp.einsum("oc,ncl->nol", w1, xn, precision="highest") + b1.reshape(1, -1, 1)
    h = jnp.maximum(h, 0.0)
    y = jnp.einsum("oc,ncl->nol", w2, h, precision="highest") + b2.reshape(1, -1, 1)
    return jnp.maximum(y + x, 0.0)


if __name__ == "__main__":
    # Small shapes consistent with the module (x is (batch, channels, length)).
    # L chosen as a multiple of 128 so the demo exercises the lane-dense,
    # unmasked-store tiling path; in_channels == out_channels (downsample=None).
    N, C, L = 2, 8, 128

    key = jax.random.PRNGKey(0)
    kx, kg, kb, kw1, kb1, kw2, kb2 = jax.random.split(key, 7)

    x = jax.random.normal(kx, (N, C, L), dtype=jnp.float32)

    gamma = 1.0 + 0.1 * jax.random.normal(kg, (C, 1), dtype=jnp.float32)   # BN weight
    beta = 0.1 * jax.random.normal(kb, (C, 1), dtype=jnp.float32)          # BN bias
    w1 = jax.random.normal(kw1, (C, C), dtype=jnp.float32) / jnp.sqrt(C)   # conv1 (k=1)
    b1 = 0.1 * jax.random.normal(kb1, (C, 1), dtype=jnp.float32)
    w2 = jax.random.normal(kw2, (C, C), dtype=jnp.float32) / jnp.sqrt(C)   # conv2 (k=1)
    b2 = 0.1 * jax.random.normal(kb2, (C, 1), dtype=jnp.float32)

    out = jax.block_until_ready(rescnn_forward(x, gamma, beta, w1, b1, w2, b2))

    ref = rescnn_reference(x, gamma, beta, w1, b1, w2, b2)
    if not jnp.allclose(out, ref, atol=1e-4, rtol=1e-4):
        max_err = float(jnp.max(jnp.abs(out - ref)))
        raise AssertionError(
            f"Pallas ResCNN kernel does not match reference (max abs err={max_err})")

    print("KERNEL_OK")
</pallas_src>

<mosaic_0001>
module attributes {stable_mosaic.version = 11 : i64} {
  func.func @_rescnn_kernel(%arg0: i32, %arg1: i32, %arg2: memref<1x8x128xf32, #tpu.memory_space<vmem>>, %arg3: memref<8x8xf32, #tpu.memory_space<vmem>>, %arg4: memref<8x1xf32, #tpu.memory_space<vmem>>, %arg5: memref<8x8xf32, #tpu.memory_space<vmem>>, %arg6: memref<8x1xf32, #tpu.memory_space<vmem>>, %arg7: memref<1x8x128xf32, #tpu.memory_space<vmem>>) attributes {dimension_semantics = [#tpu.dimension_semantics<parallel>, #tpu.dimension_semantics<parallel>], iteration_bounds = array<i64: 2, 1>, scalar_prefetch = 0 : i64, scratch_operands = 0 : i64, tpu.core_type = #tpu.core_type<tc>, window_params = [{transform_indices = @transform_0, window_bounds = array<i64: 1, 8, 128>}, {pipeline_mode = #tpu.pipeline_mode<synchronous>, transform_indices = @transform_1, window_bounds = array<i64: 8, 8>}, {pipeline_mode = #tpu.pipeline_mode<synchronous>, transform_indices = @transform_2, window_bounds = array<i64: 8, 1>}, {pipeline_mode = #tpu.pipeline_mode<synchronous>, transform_indices = @transform_3, window_bounds = array<i64: 8, 8>}, {pipeline_mode = #tpu.pipeline_mode<synchronous>, transform_indices = @transform_4, window_bounds = array<i64: 8, 1>}, {transform_indices = @transform_5, window_bounds = array<i64: 1, 8, 128>}]} {
    %c0 = arith.constant 0 : index
    %c0_0 = arith.constant 0 : index
    %c0_1 = arith.constant 0 : index
    %0 = vector.load %arg2[%c0, %c0_0, %c0_1] : memref<1x8x128xf32, #tpu.memory_space<vmem>>, vector<1x8x128xf32>
    %1 = vector.shape_cast %0 : vector<1x8x128xf32> to vector<8x128xf32>
    %c0_2 = arith.constant 0 : index
    %c0_3 = arith.constant 0 : index
    %2 = vector.load %arg3[%c0_2, %c0_3] : memref<8x8xf32, #tpu.memory_space<vmem>>, vector<8x8xf32>
    %cst = arith.constant dense<0.000000e+00> : vector<8x128xf32>
    %3 = tpu.matmul %2, %1, %cst {dimension_numbers = #tpu.dot_dimension_numbers<[1], [0], [0], [1], [0, 0, 1, 1], [], []>} : vector<8x8xf32>, vector<8x128xf32>, vector<8x128xf32> -> vector<8x128xf32>
    %c0_4 = arith.constant 0 : index
    %c0_5 = arith.constant 0 : index
    %4 = vector.load %arg4[%c0_4, %c0_5] : memref<8x1xf32, #tpu.memory_space<vmem>>, vector<8x1xf32>
    %5 = vector.broadcast %4 : vector<8x1xf32> to vector<8x128xf32>
    %6 = arith.addf %3, %5 : vector<8x128xf32>
    %cst_6 = arith.constant 0.000000e+00 : f32
    %7 = vector.broadcast %cst_6 : f32 to vector<8x128xf32>
    %8 = arith.maximumf %6, %7 : vector<8x128xf32>
    %c0_7 = arith.constant 0 : index
    %c0_8 = arith.constant 0 : index
    %9 = vector.load %arg5[%c0_7, %c0_8] : memref<8x8xf32, #tpu.memory_space<vmem>>, vector<8x8xf32>
    %cst_9 = arith.constant dense<0.000000e+00> : vector<8x128xf32>
    %10 = tpu.matmul %9, %8, %cst_9 {dimension_numbers = #tpu.dot_dimension_numbers<[1], [0], [0], [1], [0, 0, 1, 1], [], []>} : vector<8x8xf32>, vector<8x128xf32>, vector<8x128xf32> -> vector<8x128xf32>
    %c0_10 = arith.constant 0 : index
    %c0_11 = arith.constant 0 : index
    %11 = vector.load %arg6[%c0_10, %c0_11] : memref<8x1xf32, #tpu.memory_space<vmem>>, vector<8x1xf32>
    %12 = vector.broadcast %11 : vector<8x1xf32> to vector<8x128xf32>
    %13 = arith.addf %10, %12 : vector<8x128xf32>
    %14 = arith.addf %13, %1 : vector<8x128xf32>
    %cst_12 = arith.constant 0.000000e+00 : f32
    %15 = vector.broadcast %cst_12 : f32 to vector<8x128xf32>
    %16 = arith.maximumf %14, %15 : vector<8x128xf32>
    %c0_13 = arith.constant 0 : index
    %c0_14 = arith.constant 0 : index
    %c0_15 = arith.constant 0 : index
    %17 = vector.load %arg7[%c0_13, %c0_14, %c0_15] : memref<1x8x128xf32, #tpu.memory_space<vmem>>, vector<1x8x128xf32>
    %18 = vector.shape_cast %17 : vector<1x8x128xf32> to vector<8x128xf32>
    %19 = vector.shape_cast %16 : vector<8x128xf32> to vector<1x8x128xf32>
    tpu.vector_store %arg7[%c0_13, %c0_14, %c0_15], %19 {strides = array<i32>} : memref<1x8x128xf32, #tpu.memory_space<vmem>>, vector<1x8x128xf32>,
    return
  }
  func.func @transform_0(%arg0: i32, %arg1: i32) -> (i32, i32, i32) {
    %c0_i32 = arith.constant 0 : i32
    %c0_i32_0 = arith.constant 0 : i32
    return %arg0, %c0_i32, %arg1 : i32, i32, i32
  }
  func.func @transform_1(%arg0: i32, %arg1: i32) -> (i32, i32) {
    %c0_i32 = arith.constant 0 : i32
    %c0_i32_0 = arith.constant 0 : i32
    %c0_i32_1 = arith.constant 0 : i32
    return %c0_i32, %c0_i32_0 : i32, i32
  }
  func.func @transform_2(%arg0: i32, %arg1: i32) -> (i32, i32) {
    %c0_i32 = arith.constant 0 : i32
    %c0_i32_0 = arith.constant 0 : i32
    %c0_i32_1 = arith.constant 0 : i32
    return %c0_i32, %c0_i32_0 : i32, i32
  }
  func.func @transform_3(%arg0: i32, %arg1: i32) -> (i32, i32) {
    %c0_i32 = arith.constant 0 : i32
    %c0_i32_0 = arith.constant 0 : i32
    %c0_i32_1 = arith.constant 0 : i32
    return %c0_i32, %c0_i32_0 : i32, i32
  }
  func.func @transform_4(%arg0: i32, %arg1: i32) -> (i32, i32) {
    %c0_i32 = arith.constant 0 : i32
    %c0_i32_0 = arith.constant 0 : i32
    %c0_i32_1 = arith.constant 0 : i32
    return %c0_i32, %c0_i32_0 : i32, i32
  }
  func.func @transform_5(%arg0: i32, %arg1: i32) -> (i32, i32, i32) {
    %c0_i32 = arith.constant 0 : i32
    %c0_i32_0 = arith.constant 0 : i32
    return %arg0, %c0_i32, %arg1 : i32, i32, i32
  }
}

</mosaic_0001>

<llo_original>
// kernel: tpu_custom_call.1
$region0: #{tpu_custom_call.1}
  #allocation0 [shape = 'u32[]', space=smem, size = 0x4, offset = 0x4, fixed_abs, tag = 'smem constant byte address 0x4 - core index']
  #allocation1 [shape = 'u32[144,128]{1,0:T(1,128)}', space=vmem, size = 0x12000, scoped, tag = 'internal scratch']
  %s0 = inlined_call_operand.vmem [shape: f32[2,8,128], index: 0, kind: input, shape index: {}]
  %s1 = inlined_call_operand.hbm [shape: f32[8,8], index: 1, kind: input, shape index: {}]
  %s2 = inlined_call_operand.vmem [shape: f32[8,1], index: 2, kind: input, shape index: {}]
  %s3 = inlined_call_operand.hbm [shape: f32[8,8], index: 3, kind: input, shape index: {}]
  %s4 = inlined_call_operand.vmem [shape: f32[8,1], index: 4, kind: input, shape index: {}]
  %s5 = inlined_call_operand.hbm [shape: f32[2,8,128], index: 5, kind: output, shape index: {}]
  %s6 = sld [smem:[#allocation0]]
  $region61: #{tpu_custom_call.1} parent=0
    _
  %s8 = ssub.s32 1, %s6
  %s9 = scalar_select 0, %s8, %s6
  $region1: #{tpu_custom_call.1} parent=0
    #allocation2 [shape = 'u8[4096]{0}', space=vmem, size = 0x1000, scoped, tag = 'input window, operand 1, single buffered']
    #allocation3 [shape = 's32[2]{0}', space=sflag, size = 0x8, scoped, tag = 'scoped memory for tpu_custom_call.1']
    #allocation4 [shape = 's32[2]{0}', space=sflag, size = 0x8, scoped, tag = 'scoped memory for tpu_custom_call.1']
    #allocation5 [shape = 'u8[4096]{0}', space=vmem, size = 0x1000, scoped, tag = 'input window, operand 3, single buffered']
    #allocation6 [shape = 's32[1]{0}', space=sflag, size = 0x4, scoped, tag = 'scoped memory for tpu_custom_call.1']
    #allocation7 [shape = 'u8[8192]{0}', space=vmem, size = 0x2000, scoped, tag = 'output window, operand 0']
    %10 = vsyncpa [#allocation3], 0
    %11 = vsyncpa [#allocation6], 0
    %12 = vsyncpa [#allocation4], 0
    %s13 = scalar_lea.sflag [#allocation4], 1
    %14 = vsyncpa %s13, 0
    loop: start=0, step=1, limit=4
    $region2: #{tpu_custom_call.1} parent=1 // loop_pre_header
      _
    $region3: #{tpu_custom_call.1} parent=1 // loop_header
      %s16 = sphi 0, %s20
      %p17 = scmp.ge.s32.totalorder %s16, 4
      %s23 = sphi 0, %s35
      %s24 = sphi 0, %s31
      %s25 = sphi 0, %s23
      %s26 = sphi 0, %s24
      %s27 = sphi 0, %s25
      %s28 = sphi 0, %s26
      %s40 = sphi 0, %s42
      %s43 = sphi 0, %s40
      %s44 = sphi 0, %s43
      %s60 = sphi 0, %s44
      %s64 = sphi 0, %s64
      %s66 = sphi 0, %s64
      %s67 = sphi 0, %s66
      %s81 = sphi 0, %s67
      %s85 = sphi 0, %s85
      %s87 = sphi 0, %s85
      %s88 = sphi 0, %s87
      %s102 = sphi 0, %s88
      %s106 = sphi 0, %s106
      %s108 = sphi 0, %s106
      %s109 = sphi 0, %s108
      %s123 = sphi 0, %s109
      %s127 = sphi 0, %s127
      %s129 = sphi 0, %s127
      %s130 = sphi 0, %s129
      %s144 = sphi 0, %s130
      %s152 = sphi 0, %s154
      %s155 = sphi 0, %s152
      %s156 = sphi 0, %s155
      %s172 = sphi 0, %s156
    $region4: #{tpu_custom_call.1} parent=1 // loop_header_branch
      %19 = sbr.rel (%p17) target = $region8
    $region5: #{tpu_custom_call.1} parent=1 // loop_body
      %s21 = ssub.s32 %s16, 1
      %s22 = ssub.s32 %s16, 2
      %s29 = sadd.s32 1, %s24
      %p30 = scmp.ge.s32.totalorder %s29, 1
      %s31 = scalar_select %p30, 0, %s29
      %s32 = sadd.s32 1, %s23
      %s33 = scalar_select %p30, %s32, %s23
      %p34 = scmp.ge.s32.totalorder %s33, 2
      %s35 = scalar_select %p34, 0, %s33
      %s36 = ssub.s32 %s23, %s35
      %s37 = ssub.s32 %s24, %s31
      %s38 = sor.u32 %s36, %s37
      %p39 = scmp.eq.s32.totalorder %s38, 0
      %s41 = sadd.s32 %s40, 1
      %s42 = scalar_select %p39, %s40, %s41
      %p45 = pneg %p39
      %p46 = scmp.eq.s32.totalorder %s16, 1
      %p47 = por %p45, %p46
      %p48 = scmp.ne.s32.totalorder %s40, %s43
      %p49 = scmp.eq.s32.totalorder %s16, 0
      %p50 = por %p48, %p49
      %p51 = scmp.ne.s32.totalorder %s40, %s43
      %p52 = scmp.eq.s32.totalorder %s21, 1
      %p53 = por %p51, %p52
      %p54 = scmp.ne.s32.totalorder %s43, %s44
      %p55 = scmp.eq.s32.totalorder %s21, 0
      %p56 = por %p54, %p55
      %p57 = scmp.ne.s32.totalorder %s43, %s44
      %p58 = scmp.eq.s32.totalorder %s22, 1
      %p59 = por %p57, %p58
      %p61 = scmp.ne.s32.totalorder %s44, %s60
      %p62 = scmp.eq.s32.totalorder %s22, 0
      %p63 = por %p61, %p62
      %s65 = sadd.s32 %s64, 1
      %p68 = scmp.eq.s32.totalorder %s16, 1
      %p69 = scmp.ne.s32.totalorder %s64, %s66
      %p70 = scmp.eq.s32.totalorder %s16, 0
      %p71 = por %p69, %p70
      %p72 = scmp.ne.s32.totalorder %s64, %s66
      %p73 = scmp.eq.s32.totalorder %s21, 1
      %p74 = por %p72, %p73
      %p75 = scmp.ne.s32.totalorder %s66, %s67
      %p76 = scmp.eq.s32.totalorder %s21, 0
      %p77 = por %p75, %p76
      %p78 = scmp.ne.s32.totalorder %s66, %s67
      %p79 = scmp.eq.s32.totalorder %s22, 1
      %p80 = por %p78, %p79
      %p82 = scmp.ne.s32.totalorder %s67, %s81
      %p83 = scmp.eq.s32.totalorder %s22, 0
      %p84 = por %p82, %p83
      %s86 = sadd.s32 %s85, 1
      %p89 = scmp.eq.s32.totalorder %s16, 1
      %p90 = scmp.ne.s32.totalorder %s85, %s87
      %p91 = scmp.eq.s32.totalorder %s16, 0
      %p92 = por %p90, %p91
      %p93 = scmp.ne.s32.totalorder %s85, %s87
      %p94 = scmp.eq.s32.totalorder %s21, 1
      %p95 = por %p93, %p94
      %p96 = scmp.ne.s32.totalorder %s87, %s88
      %p97 = scmp.eq.s32.totalorder %s21, 0
      %p98 = por %p96, %p97
      %p99 = scmp.ne.s32.totalorder %s87, %s88
      %p100 = scmp.eq.s32.totalorder %s22, 1
      %p101 = por %p99, %p100
      %p103 = scmp.ne.s32.totalorder %s88, %s102
      %p104 = scmp.eq.s32.totalorder %s22, 0
      %p105 = por %p103, %p104
      %s107 = sadd.s32 %s106, 1
      %p110 = scmp.eq.s32.totalorder %s16, 1
      %p111 = scmp.ne.s32.totalorder %s106, %s108
      %p112 = scmp.eq.s32.totalorder %s16, 0
      %p113 = por %p111, %p112
      %p114 = scmp.ne.s32.totalorder %s106, %s108
      %p115 = scmp.eq.s32.totalorder %s21, 1
      %p116 = por %p114, %p115
      %p117 = scmp.ne.s32.totalorder %s108, %s109
      %p118 = scmp.eq.s32.totalorder %s21, 0
      %p119 = por %p117, %p118
      %p120 = scmp.ne.s32.totalorder %s108, %s109
      %p121 = scmp.eq.s32.totalorder %s22, 1
      %p122 = por %p120, %p121
      %p124 = scmp.ne.s32.totalorder %s109, %s123
      %p125 = scmp.eq.s32.totalorder %s22, 0
      %p126 = por %p124, %p125
      %s128 = sadd.s32 %s127, 1
      %p131 = scmp.eq.s32.totalorder %s16, 1
      %p132 = scmp.ne.s32.totalorder %s127, %s129
      %p133 = scmp.eq.s32.totalorder %s16, 0
      %p134 = por %p132, %p133
      %p135 = scmp.ne.s32.totalorder %s127, %s129
      %p136 = scmp.eq.s32.totalorder %s21, 1
      %p137 = por %p135, %p136
      %p138 = scmp.ne.s32.totalorder %s129, %s130
      %p139 = scmp.eq.s32.totalorder %s21, 0
      %p140 = por %p138, %p139
      %p141 = scmp.ne.s32.totalorder %s129, %s130
      %p142 = scmp.eq.s32.totalorder %s22, 1
      %p143 = por %p141, %p142
      %p145 = scmp.ne.s32.totalorder %s130, %s144
      %p146 = scmp.eq.s32.totalorder %s22, 0
      %p147 = por %p145, %p146
      %s148 = ssub.s32 %s23, %s35
      %s149 = ssub.s32 %s24, %s31
      %s150 = sor.u32 %s148, %s149
      %p151 = scmp.eq.s32.totalorder %s150, 0
      %s153 = sadd.s32 %s152, 1
      %s154 = scalar_select %p151, %s152, %s153
      %p157 = pneg %p151
      %p158 = scmp.eq.s32.totalorder %s16, 1
      %p159 = por %p157, %p158
      %p160 = scmp.ne.s32.totalorder %s152, %s155
      %p161 = scmp.eq.s32.totalorder %s16, 0
      %p162 = por %p160, %p161
      %p163 = scmp.ne.s32.totalorder %s152, %s155
      %p164 = scmp.eq.s32.totalorder %s21, 1
      %p165 = por %p163, %p164
      %p166 = scmp.ne.s32.totalorder %s155, %s156
      %p167 = scmp.eq.s32.totalorder %s21, 0
      %p168 = por %p166, %p167
      %p169 = scmp.ne.s32.totalorder %s155, %s156
      %p170 = scmp.eq.s32.totalorder %s22, 1
      %p171 = por %p169, %p170
      %p173 = scmp.ne.s32.totalorder %s156, %s172
      %p174 = scmp.eq.s32.totalorder %s22, 0
      %p175 = por %p173, %p174
      %p176 = scmp.le.s32.totalorder 1, %s16
      %p177 = scmp.lt.s32.totalorder %s16, 3
      %p178 = pnand %p176, %p177
      %p179 = pneg %p178
      // Predicated region
      $region9: #{tpu_custom_call.1} parent=5 // pred_check
        _
      $region10: #{tpu_custom_call.1} parent=5 // pred_check_branch
        %181 = sbr.rel (%p178) target = $region12
      $region11: #{tpu_custom_call.1} parent=5 // pred_region
        %s182 = ssub.s32 %s16, 1
        // Predicated region
        $region13: #{tpu_custom_call.1} parent=11 // pred_check
          %p183 = pneg %p77
        $region14: #{tpu_custom_call.1} parent=11 // pred_check_branch
          %185 = sbr.rel (%p183) target = $region16
        $region15: #{tpu_custom_call.1} parent=11 // pred_region
          %s187 = ssub.s32 128, 128
          %188 = vsyncadd [#allocation3], %s187
          %s190 = sshll.u32 [#allocation2], 4
          %s191 = int_to_ptr.vmem [resolvable:$true] %s190
          %193 = dma.hbm_to_vmem [thread:$0]  %s1, 128, %s191, [#allocation3]
        $region16: #{tpu_custom_call.1} parent=11 // pred_fallthru
          _
        // Predicated region
        $region17: #{tpu_custom_call.1} parent=11 // pred_check
          %p194 = pneg %p98
        $region18: #{tpu_custom_call.1} parent=11 // pred_check_branch
          %196 = sbr.rel (%p194) target = $region20
        $region19: #{tpu_custom_call.1} parent=11 // pred_region
          _
        $region20: #{tpu_custom_call.1} parent=11 // pred_fallthru
          _
        // Predicated region
        $region21: #{tpu_custom_call.1} parent=11 // pred_check
          %p197 = pneg %p119
        $region22: #{tpu_custom_call.1} parent=11 // pred_check_branch
          %199 = sbr.rel (%p197) target = $region24
        $region23: #{tpu_custom_call.1} parent=11 // pred_region
          %s201 = ssub.s32 128, 128
          %202 = vsyncadd [#allocation6], %s201
          %s204 = sshll.u32 [#allocation5], 4
          %s205 = int_to_ptr.vmem [resolvable:$true] %s204
          %207 = dma.hbm_to_vmem [thread:$0]  %s3, 128, %s205, [#allocation6]
        $region24: #{tpu_custom_call.1} parent=11 // pred_fallthru
          _
        // Predicated region
        $region25: #{tpu_custom_call.1} parent=11 // pred_check
          %p208 = pneg %p140
        $region26: #{tpu_custom_call.1} parent=11 // pred_check_branch
          %210 = sbr.rel (%p208) target = $region28
        $region27: #{tpu_custom_call.1} parent=11 // pred_region
          _
        $region28: #{tpu_custom_call.1} parent=11 // pred_fallthru
          _
      $region12: #{tpu_custom_call.1} parent=5 // pred_fallthru
        _
      %p211 = scmp.lt.s32.totalorder %s16, 2
      // Predicated region
      $region29: #{tpu_custom_call.1} parent=5 // pred_check
        %p212 = pneg %p211
      $region30: #{tpu_custom_call.1} parent=5 // pred_check_branch
        %214 = sbr.rel (%p212) target = $region32
      $region31: #{tpu_custom_call.1} parent=5 // pred_region
        // Predicated region
        $region33: #{tpu_custom_call.1} parent=31 // pred_check
          %p215 = pneg %p50
        $region34: #{tpu_custom_call.1} parent=31 // pred_check_branch
          %217 = sbr.rel (%p215) target = $region36
        $region35: #{tpu_custom_call.1} parent=31 // pred_region
          %p218 = scmp.lt.s32.totalorder %s23, 1
          %s219 = scalar_select %p218, %s23, 1
          %p220 = scmp.lt.s32.totalorder %s24, 0
          %s221 = scalar_select %p220, %s24, 0
          %s222 = sadd.s32 %s221, %s219
          %s223 = smul.addr %s222, 8
          %s224 = scalar_lea.vmem %s0, %s223
        $region36: #{tpu_custom_call.1} parent=31 // pred_fallthru
          _
      $region32: #{tpu_custom_call.1} parent=5 // pred_fallthru
        _
      %p225 = scmp.le.s32.totalorder 1, %s16
      %p226 = scmp.lt.s32.totalorder %s16, 3
      %p227 = pnand %p225, %p226
      %p228 = pneg %p227
      // Predicated region
      $region37: #{tpu_custom_call.1} parent=5 // pred_check
        _
      $region38: #{tpu_custom_call.1} parent=5 // pred_check_branch
        %230 = sbr.rel (%p227) target = $region40
      $region39: #{tpu_custom_call.1} parent=5 // pred_region
        %s231 = ssub.s32 %s16, 1
        // Predicated region
        $region41: #{tpu_custom_call.1} parent=39 // pred_check
          %p232 = pneg %p77
        $region42: #{tpu_custom_call.1} parent=39 // pred_check_branch
          %234 = sbr.rel (%p232) target = $region44
        $region43: #{tpu_custom_call.1} parent=39 // pred_region
          %235 = dma.done [#allocation3], 128
        $region44: #{tpu_custom_call.1} parent=39 // pred_fallthru
          _
        // Predicated region
        $region45: #{tpu_custom_call.1} parent=39 // pred_check
          %p236 = pneg %p119
        $region46: #{tpu_custom_call.1} parent=39 // pred_check_branch
          %238 = sbr.rel (%p236) target = $region48
        $region47: #{tpu_custom_call.1} parent=39 // pred_region
          %239 = dma.done [#allocation6], 128
        $region48: #{tpu_custom_call.1} parent=39 // pred_fallthru
          _
        %p240 = scmp.lt.s32.totalorder %s25, 1
        %s241 = scalar_select %p240, %s25, 1
        %p242 = scmp.lt.s32.totalorder %s26, 0
        %s243 = scalar_select %p242, %s26, 0
        %s244 = sadd.s32 %s243, %s241
        %s245 = smul.addr %s244, 8
        %s246 = scalar_lea.vmem %s0, %s245
        %p247 = pneg %p56
        %p248 = pneg %p53
        %p249 = pneg %p77
        %p250 = pneg %p74
        %p251 = pneg %p98
        %p252 = pneg %p95
        %p253 = pneg %p119
        %p254 = pneg %p116
        %p255 = pneg %p140
        %p256 = pneg %p137
        %p257 = pneg %p168
        %p258 = pneg %p165
        %s259 = sand.u32 %s155, 1
        %s260 = scalar_lea.sflag [#allocation4], %s259
        %s261 = sand.u32 %s155, 1
        %s262 = smul.addr %s261, 8
        %s263 = scalar_lea.vmem [#allocation7], %s262
        %p264 = scmp.lt.s32.totalorder %s25, 1
        %s265 = scalar_select %p264, %s25, 1
        %p266 = scmp.lt.s32.totalorder %s26, 0
        %s267 = scalar_select %p266, %s26, 0
        %s268 = sadd.s32 %s267, %s265
        %s269 = smul.addr %s268, 8
        %s270 = scalar_lea.vmem %s0, %s269
        %v271 = vld [vmem:[%s270] sm:$0xff]
        %v272 = vld [vmem:[#allocation2] sm:$0xff]
        %v273 = vld [vmem:[%s2] sm:$0xff]
        %275 = vset.pattern.permute.xlu0 0
        %276 = vperm.xlu0 %275, %v273
        %v277 = vpop.permute.xlu0 %276
        %vm279 = vcmask 64512
        %v281 = vsel %vm279, %v272, 0
        %283 = vmatprep.subr.mxu0 0.0
        %284 = vmatpush1.msra.mxu0 0.0
        %285 = vmatprep.subr.mxu0 0.0
        %286 = vmatpush1.msra.mxu0 0.0
        %287 = vmatprep.subr.mxu0 0.0
        %288 = vmatpush1.msra.mxu0 0.0
        %289 = vmatprep.subr.mxu0 0.0
        %290 = vmatpush1.msra.mxu0 0.0
        %291 = vmatprep.subr.mxu0 0.0
        %292 = vmatpush1.msra.mxu0 0.0
        %293 = vmatprep.subr.mxu0 0.0
        %294 = vmatpush1.msra.mxu0 0.0
        %295 = vmatprep.subr.mxu0 0.0
        %296 = vmatpush1.msra.mxu0 0.0
        %297 = vmatprep.subr.mxu0 0.0
        %298 = vmatpush1.msra.mxu0 0.0
        %299 = vmatprep.subr.mxu0 0.0
        %300 = vmatpush1.msra.mxu0 0.0
        %301 = vmatprep.subr.mxu0 0.0
        %302 = vmatpush1.msra.mxu0 0.0
        %303 = vmatprep.subr.mxu0 0.0
        %304 = vmatpush1.msra.mxu0 0.0
        %305 = vmatprep.subr.mxu0 0.0
        %306 = vmatpush1.msra.mxu0 0.0
        %307 = vmatprep.subr.mxu0 0.0
        %308 = vmatpush1.msra.mxu0 0.0
        %309 = vmatprep.subr.mxu0 0.0
        %310 = vmatpush1.msra.mxu0 0.0
        %311 = vmatprep.subr.mxu0 0.0
        %312 = vmatpush1.msra.mxu0 0.0
        %313 = vmatprep.subr.mxu0 0.0
        %314 = vmatpush1.msra.mxu0 %v271
        %315 = vmatprep.subr.mxu0 0.0
        %316 = vmatpush2.msra.mxu0 0.0
        %317 = vmatprep.subr.mxu0 0.0
        %318 = vmatpush2.msra.mxu0 0.0
        %319 = vmatprep.subr.mxu0 0.0
        %320 = vmatpush2.msra.mxu0 0.0
        %321 = vmatprep.subr.mxu0 0.0
        %322 = vmatpush2.msra.mxu0 0.0
        %323 = vmatprep.subr.mxu0 0.0
        %324 = vmatpush2.msra.mxu0 0.0
        %325 = vmatprep.subr.mxu0 0.0
        %326 = vmatpush2.msra.mxu0 0.0
        %327 = vmatprep.subr.mxu0 0.0
        %328 = vmatpush2.msra.mxu0 0.0
        %329 = vmatprep.subr.mxu0 0.0
        %330 = vmatpush2.msra.mxu0 0.0
        %331 = vmatprep.subr.mxu0 0.0
        %332 = vmatpush2.msra.mxu0 0.0
        %333 = vmatprep.subr.mxu0 0.0
        %334 = vmatpush2.msra.mxu0 0.0
        %335 = vmatprep.subr.mxu0 0.0
        %336 = vmatpush2.msra.mxu0 0.0
        %337 = vmatprep.subr.mxu0 0.0
        %338 = vmatpush2.msra.mxu0 0.0
        %339 = vmatprep.subr.mxu0 0.0
        %340 = vmatpush2.msra.mxu0 0.0
        %341 = vmatprep.subr.mxu0 0.0
        %342 = vmatpush2.msra.mxu0 0.0
        %343 = vmatprep.subr.mxu0 0.0
        %344 = vmatpush2.msra.mxu0 0.0
        %345 = vmatprep.subr.mxu0 0.0
        %346 = vmatpush2.msra.mxu0 0.0
        %347 = vmatprep.mubr.f32.mxu0 0.0
        %348 = vmatmul.mubr.f32.gmra.mxu0 %v281
        %v349 = vpop.f32.mrf.mxu0
        %v350 = vadd.f32 %v277, %v349
        %v351 = vpop.f32.mrf.mxu0
        %352 = vdwg.mxu0
        %v353 = vmax.f32 %v350, 0.0
        %v354 = vld [vmem:[#allocation5] sm:$0xff]
        %v355 = vld [vmem:[%s4] sm:$0xff]
        %357 = vset.pattern.permute.xlu0 0
        %358 = vperm.xlu0 %357, %v355
        %v359 = vpop.permute.xlu0 %358
        %v362 = vsel %vm279, %v354, 0
        %364 = vmatprep.subr.mxu0 0.0
        %365 = vmatpush1.msra.mxu0 0.0
        %366 = vmatprep.subr.mxu0 0.0
        %367 = vmatpush1.msra.mxu0 0.0
        %368 = vmatprep.subr.mxu0 0.0
        %369 = vmatpush1.msra.mxu0 0.0
        %370 = vmatprep.subr.mxu0 0.0
        %371 = vmatpush1.msra.mxu0 0.0
        %372 = vmatprep.subr.mxu0 0.0
        %373 = vmatpush1.msra.mxu0 0.0
        %374 = vmatprep.subr.mxu0 0.0
        %375 = vmatpush1.msra.mxu0 0.0
        %376 = vmatprep.subr.mxu0 0.0
        %377 = vmatpush1.msra.mxu0 0.0
        %378 = vmatprep.subr.mxu0 0.0
        %379 = vmatpush1.msra.mxu0 0.0
        %380 = vmatprep.subr.mxu0 0.0
        %381 = vmatpush1.msra.mxu0 0.0
        %382 = vmatprep.subr.mxu0 0.0
        %383 = vmatpush1.msra.mxu0 0.0
        %384 = vmatprep.subr.mxu0 0.0
        %385 = vmatpush1.msra.mxu0 0.0
        %386 = vmatprep.subr.mxu0 0.0
        %387 = vmatpush1.msra.mxu0 0.0
        %388 = vmatprep.subr.mxu0 0.0
        %389 = vmatpush1.msra.mxu0 0.0
        %390 = vmatprep.subr.mxu0 0.0
        %391 = vmatpush1.msra.mxu0 0.0
        %392 = vmatprep.subr.mxu0 0.0
        %393 = vmatpush1.msra.mxu0 0.0
        %394 = vmatprep.subr.mxu0 0.0
        %395 = vmatpush1.msra.mxu0 %v353
        %396 = vmatprep.subr.mxu0 0.0
        %397 = vmatpush2.msra.mxu0 0.0
        %398 = vmatprep.subr.mxu0 0.0
        %399 = vmatpush2.msra.mxu0 0.0
        %400 = vmatprep.subr.mxu0 0.0
        %401 = vmatpush2.msra.mxu0 0.0
        %402 = vmatprep.subr.mxu0 0.0
        %403 = vmatpush2.msra.mxu0 0.0
        %404 = vmatprep.subr.mxu0 0.0
        %405 = vmatpush2.msra.mxu0 0.0
        %406 = vmatprep.subr.mxu0 0.0
        %407 = vmatpush2.msra.mxu0 0.0
        %408 = vmatprep.subr.mxu0 0.0
        %409 = vmatpush2.msra.mxu0 0.0
        %410 = vmatprep.subr.mxu0 0.0
        %411 = vmatpush2.msra.mxu0 0.0
        %412 = vmatprep.subr.mxu0 0.0
        %413 = vmatpush2.msra.mxu0 0.0
        %414 = vmatprep.subr.mxu0 0.0
        %415 = vmatpush2.msra.mxu0 0.0
        %416 = vmatprep.subr.mxu0 0.0
        %417 = vmatpush2.msra.mxu0 0.0
        %418 = vmatprep.subr.mxu0 0.0
        %419 = vmatpush2.msra.mxu0 0.0
        %420 = vmatprep.subr.mxu0 0.0
        %421 = vmatpush2.msra.mxu0 0.0
        %422 = vmatprep.subr.mxu0 0.0
        %423 = vmatpush2.msra.mxu0 0.0
        %424 = vmatprep.subr.mxu0 0.0
        %425 = vmatpush2.msra.mxu0 0.0
        %426 = vmatprep.subr.mxu0 0.0
        %427 = vmatpush2.msra.mxu0 0.0
        %428 = vmatprep.mubr.f32.mxu0 0.0
        %429 = vmatmul.mubr.f32.gmra.mxu0 %v362
        %v430 = vpop.f32.mrf.mxu0
        %v431 = vadd.f32 %v359, %v430
        %v432 = vpop.f32.mrf.mxu0
        %433 = vdwg.mxu0
        %v434 = vadd.f32 %v431, %v271
        %v435 = vmax.f32 %v434, 0.0
        %436 = vst [vmem:[%s263] sm:$0xff] %v435
        %s437 = sand.u32 %s155, 1
        %s438 = scalar_lea.sflag [#allocation4], %s437
        %s439 = sand.u32 %s155, 1
        %s440 = smul.addr %s439, 8
        %s441 = scalar_lea.vmem [#allocation7], %s440
        // Predicated region
        $region49: #{tpu_custom_call.1} parent=39 // pred_check
          %p442 = pneg %p165
        $region50: #{tpu_custom_call.1} parent=39 // pred_check_branch
          %444 = sbr.rel (%p442) target = $region52
        $region51: #{tpu_custom_call.1} parent=39 // pred_region
          %s446 = ssub.s32 128, 128
          %447 = vsyncadd %s438, %s446
          %s448 = sadd.s32 %s26, %s25
          %s449 = smul.addr %s448, 128
          %s450 = scalar_lea.hbm %s5, %s449
          %s452 = sshll.u32 %s441, 4
          %s453 = int_to_ptr.vmem [resolvable:$true] %s452
          %455 = dma.vmem_to_hbm [thread:$0]  %s453, 128, %s450, %s438
        $region52: #{tpu_custom_call.1} parent=39 // pred_fallthru
          _
      $region40: #{tpu_custom_call.1} parent=5 // pred_fallthru
        _
      %p456 = scmp.le.s32.totalorder 2, %s16
      // Predicated region
      $region53: #{tpu_custom_call.1} parent=5 // pred_check
        %p457 = pneg %p456
      $region54: #{tpu_custom_call.1} parent=5 // pred_check_branch
        %459 = sbr.rel (%p457) target = $region56
      $region55: #{tpu_custom_call.1} parent=5 // pred_region
        %s460 = ssub.s32 %s16, 2
        // Predicated region
        $region57: #{tpu_custom_call.1} parent=55 // pred_check
          %p461 = pneg %p171
        $region58: #{tpu_custom_call.1} parent=55 // pred_check_branch
          %463 = sbr.rel (%p461) target = $region60
        $region59: #{tpu_custom_call.1} parent=55 // pred_region
          %s464 = sand.u32 %s156, 1
          %s465 = scalar_lea.sflag [#allocation4], %s464
          %s466 = sand.u32 %s156, 1
          %s467 = smul.addr %s466, 8
          %s468 = scalar_lea.vmem [#allocation7], %s467
          %469 = dma.done %s465, 128
        $region60: #{tpu_custom_call.1} parent=55 // pred_fallthru
          _
      $region56: #{tpu_custom_call.1} parent=5 // pred_fallthru
        _
    $region6: #{tpu_custom_call.1} parent=1 // loop_footer
      %s20 = sadd.s32 1, %s16
    $region7: #{tpu_custom_call.1} parent=1 // loop_footer_branch
      %15 = sbr.rel target = $region3
    $region8: #{tpu_custom_call.1} parent=1 // loop_exit
      _
    %470 = vsyncpa [#allocation3], 1
    %s471 = scalar_lea.sflag [#allocation3], 1
    %472 = vsyncpa %s471, 1
    %473 = vsyncpa [#allocation6], 1
    %474 = vsyncpa [#allocation4], 1
    %s475 = scalar_lea.sflag [#allocation4], 1
    %476 = vsyncpa %s475, 1

</llo_original>
